<compile_context>
chip_gen: v7x
topology: tpu7x:2x2x1
jax: 0.10.0
libtpu: 0.0.40
codegen_flags: <defaults>
</compile_context>

<pallas_src>
import functools

import jax
import jax.numpy as jnp
from jax.experimental import pallas as pl
from jax.experimental.pallas import tpu as pltpu


def _decoder_cell_kernel(
    b_out_ref,                 # SMEM (1,) f32      — output-head bias
    bits_ref,                  # VMEM (B, H) uint32 — dropout random bits
    y_ref, h_ref,              # VMEM (B, F) f32, (B, H) f32
    w_y_ref, w_h_ref,          # VMEM (F, 4H), (H, 4H) — fused gate weights (bf16)
    bias_ref,                  # VMEM (1, 4H) f32   — [b_ir+b_hr | b_iz+b_hz | b_in | b_hn]
    w_out_ref,                 # VMEM (1, H) f32    — Linear(H, 1) weight row
    out_ref, hdrop_ref,        # outputs: (B, 1) f32, (B, H) f32
    *, hidden_size: int, keep_threshold: int, keep_scale: float,
):
    H = hidden_size
    h = h_ref[...]                                   # (B, H) f32
    mxu_dtype = w_y_ref.dtype                        # bf16 operands for the MXU only

    # --- Two fused MXU matmuls → all gate pre-activations at once (B, 4H) ---
    g = (
        jnp.dot(y_ref[...].astype(mxu_dtype), w_y_ref[...],
                preferred_element_type=jnp.float32)
        + jnp.dot(h.astype(mxu_dtype), w_h_ref[...],
                  preferred_element_type=jnp.float32)
        + bias_ref[...]
    )

    # --- GRU gates (VPU/EUP, all f32) ---
    r = jax.nn.sigmoid(g[:, 0:H])
    z = jax.nn.sigmoid(g[:, H:2 * H])
    n = jnp.tanh(g[:, 2 * H:3 * H] + r * g[:, 3 * H:4 * H])
    h_new = (1.0 - z) * n + z * h                    # (B, H) f32

    # --- Linear(hidden, 1): VPU multiply + lane reduction (no N=1 MXU pass) ---
    out_ref[...] = (
        jnp.sum(h_new * w_out_ref[...], axis=-1, keepdims=True) + b_out_ref[0]
    )

    # --- Inverted dropout via uint32 threshold compare on pre-drawn bits ---
    # TODO(synk): dropout mask uses a jax.random bit-stream, so exact values differ
    # from torch's dropout RNG stream (Bernoulli(p) zeroing + 1/(1-p) scaling match).
    if keep_threshold > 0:
        keep = bits_ref[...] >= jnp.uint32(keep_threshold)
        hdrop_ref[...] = jnp.where(keep, h_new * jnp.float32(keep_scale), 0.0)
    else:
        hdrop_ref[...] = h_new


def prepare_params(params, hidden_size, *, weight_dtype=jnp.bfloat16):
    """One-time packing of PyTorch-convention params (call OUTSIDE the decode loop).

    Fused gate layout (columns): [ r | z | n_input | n_hidden ], each of width H.
      w_y = [W_ir^T  W_iz^T  W_in^T  0    ]   shape (F, 4H)
      w_h = [W_hr^T  W_hz^T  0       W_hn^T]  shape (H, 4H)
      bias = [b_ir+b_hr | b_iz+b_hz | b_in | b_hn]  shape (1, 4H)
    """
    H = hidden_size
    w_ih = params["weight_ih"]                       # (3H, F)
    w_hh = params["weight_hh"]                       # (3H, H)
    F = w_ih.shape[1]

    wir, wiz, win = w_ih[:H], w_ih[H:2 * H], w_ih[2 * H:]
    whr, whz, whn = w_hh[:H], w_hh[H:2 * H], w_hh[2 * H:]

    w_y = jnp.concatenate(
        [wir.T, wiz.T, win.T, jnp.zeros((F, H), w_ih.dtype)], axis=1)   # (F, 4H)
    w_h = jnp.concatenate(
        [whr.T, whz.T, jnp.zeros((H, H), w_hh.dtype), whn.T], axis=1)   # (H, 4H)

    b_ih, b_hh = params["bias_ih"], params["bias_hh"]
    bias = jnp.concatenate([
        b_ih[:H] + b_hh[:H],           # r
        b_ih[H:2 * H] + b_hh[H:2 * H], # z
        b_ih[2 * H:],                  # n (input side)
        b_hh[2 * H:],                  # n (hidden side)
    ]).reshape(1, 4 * H).astype(jnp.float32)

    return {
        "w_y": w_y.astype(weight_dtype),
        "w_h": w_h.astype(weight_dtype),
        "bias": bias,
        "w_out": params["out_weight"].reshape(1, H).astype(jnp.float32),
        "b_out": params["out_bias"].reshape(1).astype(jnp.float32),
    }


def decoder_cell_forward(prepared, y, prev_hidden, rng_key, *,
                         dropout_p=0.2, donate_hidden=False):
    """One DecoderCell step. `prepared` comes from prepare_params (hoisted)."""
    assert 0.0 <= dropout_p < 1.0
    B, _ = y.shape
    H = prev_hidden.shape[1]

    if dropout_p > 0.0:
        bits = jax.random.bits(rng_key, (B, H), dtype=jnp.uint32)
        keep_threshold = int(round(dropout_p * 2.0 ** 32))
        keep_scale = 1.0 / (1.0 - dropout_p)
    else:
        bits = jnp.zeros((B, H), dtype=jnp.uint32)
        keep_threshold = 0
        keep_scale = 1.0

    vmem = pl.BlockSpec(memory_space=pltpu.MemorySpace.VMEM)
    smem = pl.BlockSpec(memory_space=pltpu.MemorySpace.SMEM)

    kernel = functools.partial(
        _decoder_cell_kernel,
        hidden_size=H, keep_threshold=keep_threshold, keep_scale=keep_scale)

    # Optionally donate prev_hidden's buffer to the dropped-hidden output (P8);
    # only enable inside a decode loop where the old hidden is dead afterwards.
    io_aliases = {3: 1} if donate_hidden else {}

    out, h_drop = pl.pallas_call(
        kernel,
        out_shape=(
            jax.ShapeDtypeStruct((B, 1), jnp.float32),
            jax.ShapeDtypeStruct((B, H), jnp.float32),
        ),
        in_specs=[smem] + [vmem] * 7,
        out_specs=(vmem, vmem),
        input_output_aliases=io_aliases,
    )(prepared["b_out"], bits, y, prev_hidden,
      prepared["w_y"], prepared["w_h"], prepared["bias"], prepared["w_out"])
    return out, h_drop


def init_params(key, input_feature_len, hidden_size):
    """Deterministic init matching PyTorch GRUCell / Linear shapes & U(-k, k)."""
    ks = jax.random.split(key, 6)
    k_gru = 1.0 / jnp.sqrt(hidden_size)
    k_lin = 1.0 / jnp.sqrt(hidden_size)
    u = lambda k, shape, lim: jax.random.uniform(k, shape, jnp.float32, -lim, lim)
    return {
        "weight_ih": u(ks[0], (3 * hidden_size, input_feature_len), k_gru),
        "weight_hh": u(ks[1], (3 * hidden_size, hidden_size), k_gru),
        "bias_ih":   u(ks[2], (3 * hidden_size,), k_gru),
        "bias_hh":   u(ks[3], (3 * hidden_size,), k_gru),
        "out_weight": u(ks[4], (1, hidden_size), k_lin),
        "out_bias":   u(ks[5], (1,), k_lin),
    }


if __name__ == "__main__":
    B, F, H = 8, 8, 32        # batch, input_feature_len, hidden_size
    DROPOUT = 0.2

    root = jax.random.PRNGKey(0)
    k_param, k_y, k_h, k_drop = jax.random.split(root, 4)

    params = init_params(k_param, F, H)
    prepared = prepare_params(params, H)   # one-time packing, outside the step loop

    y = jax.random.normal(k_y, (B, F), dtype=jnp.float32)
    prev_hidden = jax.random.normal(k_h, (B, H), dtype=jnp.float32)

    output, rnn_hidden_dropped = decoder_cell_forward(
        prepared, y, prev_hidden, k_drop, dropout_p=DROPOUT)
    jax.block_until_ready((output, rnn_hidden_dropped))

    assert output.shape == (B, 1)
    assert rnn_hidden_dropped.shape == (B, H)
    print("KERNEL_OK")
</pallas_src>

<mosaic_0001>
module attributes {stable_mosaic.version = 11 : i64} {
  func.func @_decoder_cell_kernel(%arg0: memref<1xf32, #tpu.memory_space<smem>>, %arg1: memref<8x32xi32, #tpu.memory_space<vmem>>, %arg2: memref<8x8xf32, #tpu.memory_space<vmem>>, %arg3: memref<8x32xf32, #tpu.memory_space<vmem>>, %arg4: memref<8x128xbf16, #tpu.memory_space<vmem>>, %arg5: memref<32x128xbf16, #tpu.memory_space<vmem>>, %arg6: memref<1x128xf32, #tpu.memory_space<vmem>>, %arg7: memref<1x32xf32, #tpu.memory_space<vmem>>, %arg8: memref<8x1xf32, #tpu.memory_space<vmem>>, %arg9: memref<8x32xf32, #tpu.memory_space<vmem>>) attributes {dimension_semantics = [], scalar_prefetch = 0 : i64, scratch_operands = 0 : i64, tpu.core_type = #tpu.core_type<tc>} {
    %c0 = arith.constant 0 : index
    %c0_0 = arith.constant 0 : index
    %0 = vector.load %arg3[%c0, %c0_0] : memref<8x32xf32, #tpu.memory_space<vmem>>, vector<8x32xf32>
    %c0_1 = arith.constant 0 : index
    %c0_2 = arith.constant 0 : index
    %1 = vector.load %arg2[%c0_1, %c0_2] : memref<8x8xf32, #tpu.memory_space<vmem>>, vector<8x8xf32>
    %2 = arith.truncf %1 : vector<8x8xf32> to vector<8x8xbf16>
    %c0_3 = arith.constant 0 : index
    %c0_4 = arith.constant 0 : index
    %3 = vector.load %arg4[%c0_3, %c0_4] : memref<8x128xbf16, #tpu.memory_space<vmem>>, vector<8x128xbf16>
    %cst = arith.constant dense<0.000000e+00> : vector<8x128xf32>
    %4 = tpu.matmul %2, %3, %cst {dimension_numbers = #tpu.dot_dimension_numbers<[1], [0], [0], [1], [0, 0, 1, 1], [], []>} : vector<8x8xbf16>, vector<8x128xbf16>, vector<8x128xf32> -> vector<8x128xf32>
    %5 = arith.truncf %0 : vector<8x32xf32> to vector<8x32xbf16>
    %c0_5 = arith.constant 0 : index
    %c0_6 = arith.constant 0 : index
    %6 = vector.load %arg5[%c0_5, %c0_6] : memref<32x128xbf16, #tpu.memory_space<vmem>>, vector<32x128xbf16>
    %cst_7 = arith.constant dense<0.000000e+00> : vector<8x128xf32>
    %7 = tpu.matmul %5, %6, %cst_7 {dimension_numbers = #tpu.dot_dimension_numbers<[1], [0], [0], [1], [0, 0, 1, 1], [], []>} : vector<8x32xbf16>, vector<32x128xbf16>, vector<8x128xf32> -> vector<8x128xf32>
    %8 = arith.addf %4, %7 : vector<8x128xf32>
    %c0_8 = arith.constant 0 : index
    %c0_9 = arith.constant 0 : index
    %9 = vector.load %arg6[%c0_8, %c0_9] : memref<1x128xf32, #tpu.memory_space<vmem>>, vector<1x128xf32>
    %10 = vector.broadcast %9 : vector<1x128xf32> to vector<8x128xf32>
    %11 = arith.addf %8, %10 : vector<8x128xf32>
    %12 = vector.extract_strided_slice %11 {offsets = [0, 0], sizes = [8, 32], strides = [1, 1]} : vector<8x128xf32> to vector<8x32xf32>
    %13 = arith.negf %12 : vector<8x32xf32>
    %14 = math.exp %13 : vector<8x32xf32>
    %cst_10 = arith.constant 1.000000e+00 : f32
    %15 = vector.broadcast %cst_10 : f32 to vector<8x32xf32>
    %16 = arith.addf %15, %14 : vector<8x32xf32>
    %17 = arith.divf %15, %16 : vector<8x32xf32>
    %18 = vector.extract_strided_slice %11 {offsets = [0, 32], sizes = [8, 32], strides = [1, 1]} : vector<8x128xf32> to vector<8x32xf32>
    %19 = arith.negf %18 : vector<8x32xf32>
    %20 = math.exp %19 : vector<8x32xf32>
    %cst_11 = arith.constant 1.000000e+00 : f32
    %21 = vector.broadcast %cst_11 : f32 to vector<8x32xf32>
    %22 = arith.addf %21, %20 : vector<8x32xf32>
    %23 = arith.divf %21, %22 : vector<8x32xf32>
    %24 = vector.extract_strided_slice %11 {offsets = [0, 64], sizes = [8, 32], strides = [1, 1]} : vector<8x128xf32> to vector<8x32xf32>
    %25 = vector.extract_strided_slice %11 {offsets = [0, 96], sizes = [8, 32], strides = [1, 1]} : vector<8x128xf32> to vector<8x32xf32>
    %26 = arith.mulf %17, %25 : vector<8x32xf32>
    %27 = arith.addf %24, %26 : vector<8x32xf32>
    %28 = math.tanh %27 : vector<8x32xf32>
    %cst_12 = arith.constant 1.000000e+00 : f32
    %29 = vector.broadcast %cst_12 : f32 to vector<8x32xf32>
    %30 = arith.subf %29, %23 : vector<8x32xf32>
    %31 = arith.mulf %30, %28 : vector<8x32xf32>
    %32 = arith.mulf %23, %0 : vector<8x32xf32>
    %33 = arith.addf %31, %32 : vector<8x32xf32>
    %c0_13 = arith.constant 0 : index
    %c0_14 = arith.constant 0 : index
    %34 = vector.load %arg7[%c0_13, %c0_14] : memref<1x32xf32, #tpu.memory_space<vmem>>, vector<1x32xf32>
    %35 = vector.broadcast %34 : vector<1x32xf32> to vector<8x32xf32>
    %36 = arith.mulf %33, %35 : vector<8x32xf32>
    %cst_15 = arith.constant dense<0.000000e+00> : vector<8xf32>
    %37 = vector.multi_reduction <add>, %36, %cst_15 [1] : vector<8x32xf32> to vector<8xf32>
    %38 = vector.shape_cast %37 : vector<8xf32> to vector<8x1xf32>
    %c0_16 = arith.constant 0 : index
    %39 = memref.load %arg0[%c0_16] : memref<1xf32, #tpu.memory_space<smem>>
    %40 = vector.broadcast %39 : f32 to vector<8x1xf32>
    %41 = arith.addf %38, %40 : vector<8x1xf32>
    %c0_17 = arith.constant 0 : index
    %c0_18 = arith.constant 0 : index
    %42 = vector.load %arg8[%c0_17, %c0_18] : memref<8x1xf32, #tpu.memory_space<vmem>>, vector<8x1xf32>
    tpu.vector_store %arg8[%c0_17, %c0_18], %41 {strides = array<i32>} : memref<8x1xf32, #tpu.memory_space<vmem>>, vector<8x1xf32>,
    %c0_19 = arith.constant 0 : index
    %c0_20 = arith.constant 0 : index
    %43 = vector.load %arg1[%c0_19, %c0_20] : memref<8x32xi32, #tpu.memory_space<vmem>>, vector<8x32xi32>
    %c858993459_i32 = arith.constant 858993459 : i32
    %44 = vector.broadcast %c858993459_i32 : i32 to vector<8x32xi32>
    %45 = arith.cmpi uge, %43, %44 : vector<8x32xi32>
    %cst_21 = arith.constant 1.250000e+00 : f32
    %46 = vector.broadcast %cst_21 : f32 to vector<8x32xf32>
    %47 = arith.mulf %33, %46 : vector<8x32xf32>
    %cst_22 = arith.constant 0.000000e+00 : f32
    %48 = vector.broadcast %cst_22 : f32 to vector<8x32xf32>
    %49 = arith.select %45, %47, %48 : vector<8x32xi1>, vector<8x32xf32>
    %c0_23 = arith.constant 0 : index
    %c0_24 = arith.constant 0 : index
    %50 = vector.load %arg9[%c0_23, %c0_24] : memref<8x32xf32, #tpu.memory_space<vmem>>, vector<8x32xf32>
    tpu.vector_store %arg9[%c0_23, %c0_24], %49 {strides = array<i32>} : memref<8x32xf32, #tpu.memory_space<vmem>>, vector<8x32xf32>,
    return
  }
}

</mosaic_0001>

<llo_original>
// kernel: tpu_custom_call.1
$region0: #{tpu_custom_call.1}
  #allocation0 [shape = 'u32[]', space=smem, size = 0x4, offset = 0x4, fixed_abs, tag = 'smem constant byte address 0x4 - core index']
  #allocation1 [shape = 'u32[144,128]{1,0:T(1,128)}', space=vmem, size = 0x12000, scoped, tag = 'internal scratch']
  #allocation2 [shape = 'f32[1]{0:T(128)S(6)}', space=smem, size = 0x200, scoped, tag = 'scoped memory for tpu_custom_call.1']
  %s0 = inlined_call_operand.<no memory space> [shape: f32[1], index: 0, kind: input, shape index: {}]
  %s1 = inlined_call_operand.hbm [shape: u32[8,32], index: 1, kind: input, shape index: {}]
  %s2 = inlined_call_operand.hbm [shape: f32[8,8], index: 2, kind: input, shape index: {}]
  %s3 = inlined_call_operand.hbm [shape: f32[8,32], index: 3, kind: input, shape index: {}]
  %s4 = inlined_call_operand.hbm [shape: bf16[8,128], index: 4, kind: input, shape index: {}]
  %s5 = inlined_call_operand.vmem [shape: bf16[32,128], index: 5, kind: input, shape index: {}]
  %s6 = inlined_call_operand.vmem [shape: f32[1,128], index: 6, kind: input, shape index: {}]
  %s7 = inlined_call_operand.vmem [shape: f32[1,32], index: 7, kind: input, shape index: {}]
  %s8 = inlined_call_operand.vmem [shape: f32[8,1], index: 8, kind: output, shape index: {0}]
  %s9 = inlined_call_operand.hbm [shape: f32[8,32], index: 9, kind: output, shape index: {1}]
  %10 = xla_tuple %s8, %s9
  %s11 = sld [smem:[#allocation0]]
  $region66: #{tpu_custom_call.1} parent=0
    _
  %s13 = ssub.s32 1, %s11
  %s14 = scalar_select 0, %s13, %s11
  %15 = sst [smem:[#allocation2]] %s0
  $region1: #{tpu_custom_call.1} parent=0
    #allocation3 [shape = 'u8[4096]{0}', space=vmem, size = 0x1000, scoped, tag = 'input window, operand 1, single buffered']
    #allocation4 [shape = 's32[1]{0}', space=sflag, size = 0x4, scoped, tag = 'scoped memory for tpu_custom_call.1']
    #allocation5 [shape = 's32[1]{0}', space=sflag, size = 0x4, scoped, tag = 'scoped memory for tpu_custom_call.1']
    #allocation6 [shape = 'u8[4096]{0}', space=vmem, size = 0x1000, scoped, tag = 'input window, operand 2, single buffered']
    #allocation7 [shape = 's32[1]{0}', space=sflag, size = 0x4, scoped, tag = 'scoped memory for tpu_custom_call.1']
    #allocation8 [shape = 'u8[4096]{0}', space=vmem, size = 0x1000, scoped, tag = 'input window, operand 3, single buffered']
    #allocation9 [shape = 'u8[2048]{0}', space=vmem, size = 0x800, scoped, tag = 'input window, operand 4, single buffered']
    #allocation10 [shape = 's32[1]{0}', space=sflag, size = 0x4, scoped, tag = 'scoped memory for tpu_custom_call.1']
    #allocation11 [shape = 'u8[4096]{0}', space=vmem, size = 0x1000, scoped, tag = 'output window, operand 1, single buffered']
    %16 = vsyncpa [#allocation4], 0
    %17 = vsyncpa [#allocation7], 0
    %18 = vsyncpa [#allocation10], 0
    %19 = vsyncpa [#allocation5], 0
    // Predicated region
    $region2: #{tpu_custom_call.1} parent=1 // pred_check
      _
    $region3: #{tpu_custom_call.1} parent=1 // pred_check_branch
      %21 = sbr.rel (0) target = $region5
    $region4: #{tpu_custom_call.1} parent=1 // pred_region
      _
    $region5: #{tpu_custom_call.1} parent=1 // pred_fallthru
      _
    // Predicated region
    $region6: #{tpu_custom_call.1} parent=1 // pred_check
      _
    $region7: #{tpu_custom_call.1} parent=1 // pred_check_branch
      %23 = sbr.rel (0) target = $region9
    $region8: #{tpu_custom_call.1} parent=1 // pred_region
      %s25 = ssub.s32 128, 128
      %26 = vsyncadd [#allocation4], %s25
      %s28 = sshll.u32 [#allocation3], 4
      %s29 = int_to_ptr.vmem [resolvable:$true] %s28
      %31 = dma.hbm_to_vmem [thread:$0]  %s1, 128, %s29, [#allocation4]
    $region9: #{tpu_custom_call.1} parent=1 // pred_fallthru
      _
    // Predicated region
    $region10: #{tpu_custom_call.1} parent=1 // pred_check
      _
    $region11: #{tpu_custom_call.1} parent=1 // pred_check_branch
      %33 = sbr.rel (0) target = $region13
    $region12: #{tpu_custom_call.1} parent=1 // pred_region
      %s35 = ssub.s32 128, 128
      %36 = vsyncadd [#allocation7], %s35
      %s38 = sshll.u32 [#allocation6], 4
      %s39 = int_to_ptr.vmem [resolvable:$true] %s38
      %41 = dma.hbm_to_vmem [thread:$0]  %s2, 128, %s39, [#allocation7]
    $region13: #{tpu_custom_call.1} parent=1 // pred_fallthru
      _
    // Predicated region
    $region14: #{tpu_custom_call.1} parent=1 // pred_check
      _
    $region15: #{tpu_custom_call.1} parent=1 // pred_check_branch
      %43 = sbr.rel (0) target = $region17
    $region16: #{tpu_custom_call.1} parent=1 // pred_region
      %s45 = ssub.s32 128, 128
      %46 = vsyncadd [#allocation7], %s45
      %s48 = sshll.u32 [#allocation8], 4
      %s49 = int_to_ptr.vmem [resolvable:$true] %s48
      %51 = dma.hbm_to_vmem [thread:$0]  %s3, 128, %s49, [#allocation7]
    $region17: #{tpu_custom_call.1} parent=1 // pred_fallthru
      _
    // Predicated region
    $region18: #{tpu_custom_call.1} parent=1 // pred_check
      _
    $region19: #{tpu_custom_call.1} parent=1 // pred_check_branch
      %53 = sbr.rel (0) target = $region21
    $region20: #{tpu_custom_call.1} parent=1 // pred_region
      %s55 = ssub.s32 64, 64
      %56 = vsyncadd [#allocation10], %s55
      %s58 = sshll.u32 [#allocation9], 4
      %s59 = int_to_ptr.vmem [resolvable:$true] %s58
      %61 = dma.hbm_to_vmem [thread:$0]  %s4, 64, %s59, [#allocation10]
    $region21: #{tpu_custom_call.1} parent=1 // pred_fallthru
      _
    // Predicated region
    $region22: #{tpu_custom_call.1} parent=1 // pred_check
      _
    $region23: #{tpu_custom_call.1} parent=1 // pred_check_branch
      %63 = sbr.rel (0) target = $region25
    $region24: #{tpu_custom_call.1} parent=1 // pred_region
      _
    $region25: #{tpu_custom_call.1} parent=1 // pred_fallthru
      _
    // Predicated region
    $region26: #{tpu_custom_call.1} parent=1 // pred_check
      _
    $region27: #{tpu_custom_call.1} parent=1 // pred_check_branch
      %65 = sbr.rel (0) target = $region29
    $region28: #{tpu_custom_call.1} parent=1 // pred_region
      _
    $region29: #{tpu_custom_call.1} parent=1 // pred_fallthru
      _
    // Predicated region
    $region30: #{tpu_custom_call.1} parent=1 // pred_check
      _
    $region31: #{tpu_custom_call.1} parent=1 // pred_check_branch
      %67 = sbr.rel (0) target = $region33
    $region32: #{tpu_custom_call.1} parent=1 // pred_region
      _
    $region33: #{tpu_custom_call.1} parent=1 // pred_fallthru
      _
    // Predicated region
    $region34: #{tpu_custom_call.1} parent=1 // pred_check
      _
    $region35: #{tpu_custom_call.1} parent=1 // pred_check_branch
      %69 = sbr.rel (0) target = $region37
    $region36: #{tpu_custom_call.1} parent=1 // pred_region
      %70 = dma.done [#allocation4], 128
    $region37: #{tpu_custom_call.1} parent=1 // pred_fallthru
      _
    // Predicated region
    $region38: #{tpu_custom_call.1} parent=1 // pred_check
      _
    $region39: #{tpu_custom_call.1} parent=1 // pred_check_branch
      %72 = sbr.rel (0) target = $region41
    $region40: #{tpu_custom_call.1} parent=1 // pred_region
      %73 = dma.done [#allocation7], 128
    $region41: #{tpu_custom_call.1} parent=1 // pred_fallthru
      _
    // Predicated region
    $region42: #{tpu_custom_call.1} parent=1 // pred_check
      _
    $region43: #{tpu_custom_call.1} parent=1 // pred_check_branch
      %75 = sbr.rel (0) target = $region45
    $region44: #{tpu_custom_call.1} parent=1 // pred_region
      %76 = dma.done [#allocation7], 128
    $region45: #{tpu_custom_call.1} parent=1 // pred_fallthru
      _
    // Predicated region
    $region46: #{tpu_custom_call.1} parent=1 // pred_check
      _
    $region47: #{tpu_custom_call.1} parent=1 // pred_check_branch
      %78 = sbr.rel (0) target = $region49
    $region48: #{tpu_custom_call.1} parent=1 // pred_region
      %79 = dma.done [#allocation10], 64
    $region49: #{tpu_custom_call.1} parent=1 // pred_fallthru
      _
    %v81 = vld [vmem:[#allocation8] sm:$0xff]
    %v82 = vld [vmem:[#allocation6] sm:$0xff]
    %v83 = vpack.c.bf16 %v82, %v82
    %v84 = vld [vmem:[#allocation9] sm:$0xf]
    %v85 = vpack.c.bf16 %v81, %v81
    %v86 = vld [vmem:[%s5] sm:$0xf]
    %v87 = vld [vmem:[%s5 + $0x4] sm:$0xf]
    %v88 = vld [vmem:[%s5 + $0x8] sm:$0xf]
    %v89 = vld [vmem:[%s5 + $0xc] sm:$0xf]
    %v94 = vunpack.c.l.b16 %v86
    %v95 = vunpack.c.l.b16 %v87
    %v96 = vunpack.c.l.b16 %v88
    %v97 = vunpack.c.l.b16 %v89
    %v98 = vpack.c.b16 %v95, %v94
    %v99 = vpack.c.b16 %v97, %v96
    %vm102 = vcmask 261120
    %v104 = vsel %vm102, %v85, 0
    %106 = vmatprep.subr.bf16.mxu0 0
    %107 = vmatpush1.bf16.msra.mxu0 %v98
    %108 = vmatprep.subr.bf16.mxu0 0
    %109 = vmatpush1.bf16.msra.mxu0 %v99
    %110 = vmatprep.subr.bf16.mxu0 0
    %111 = vmatpush1.bf16.msra.mxu0 0
    %112 = vmatprep.subr.bf16.mxu0 0
    %113 = vmatpush1.bf16.msra.mxu0 0
    %114 = vmatprep.subr.bf16.mxu0 0
    %115 = vmatpush1.bf16.msra.mxu0 0
    %116 = vmatprep.subr.bf16.mxu0 0
    %117 = vmatpush1.bf16.msra.mxu0 0
    %118 = vmatprep.subr.bf16.mxu0 0
    %119 = vmatpush1.bf16.msra.mxu0 0
    %120 = vmatprep.subr.bf16.mxu0 0
    %121 = vmatpush1.bf16.msra.mxu0 0
    %122 = vmatprep.subr.bf16.mxu0 0
    %123 = vmatpush1.bf16.msra.mxu0 0
    %124 = vmatprep.subr.bf16.mxu0 0
    %125 = vmatpush1.bf16.msra.mxu0 0
    %126 = vmatprep.subr.bf16.mxu0 0
    %127 = vmatpush1.bf16.msra.mxu0 0
    %128 = vmatprep.subr.bf16.mxu0 0
    %129 = vmatpush1.bf16.msra.mxu0 0
    %130 = vmatprep.subr.bf16.mxu0 0
    %131 = vmatpush1.bf16.msra.mxu0 0
    %132 = vmatprep.subr.bf16.mxu0 0
    %133 = vmatpush1.bf16.msra.mxu0 0
    %134 = vmatprep.subr.bf16.mxu0 0
    %135 = vmatpush1.bf16.msra.mxu0 0
    %136 = vmatprep.subr.bf16.mxu0 0
    %137 = vmatpush1.bf16.msra.mxu0 0
    %138 = vmatprep.mubr.bf16.mxu0 0
    %139 = vmatmul.mubr.bf16.gmra.mrb[0].mxu0 %v104
    %v140 = vpop.f32.mrb[0].mxu0
    %v141 = vadd.f32 0.0, %v140
    %v142 = vpop.f32.mrb[0].mxu0
    %v143 = vpop.f32.mrb[0].mxu0
    %v144 = vpop.f32.mrb[0].mxu0
    %145 = vdwg.mxu0
    %vm146 = vcmask 64512
    %v148 = vsel %vm146, %v83, 0
    %vm150 = vcmask 1043456
    %v152 = vsel %vm150, %v84, 0
    %154 = vmatprep.subr.bf16.mxu0 0
    %155 = vmatpush1.bf16.msra.mxu0 %v152
    %156 = vmatprep.subr.bf16.mxu0 0
    %157 = vmatpush1.bf16.msra.mxu0 0
    %158 = vmatprep.subr.bf16.mxu0 0
    %159 = vmatpush1.bf16.msra.mxu0 0
    %160 = vmatprep.subr.bf16.mxu0 0
    %161 = vmatpush1.bf16.msra.mxu0 0
    %162 = vmatprep.subr.bf16.mxu0 0
    %163 = vmatpush1.bf16.msra.mxu0 0
    %164 = vmatprep.subr.bf16.mxu0 0
    %165 = vmatpush1.bf16.msra.mxu0 0
    %166 = vmatprep.subr.bf16.mxu0 0
    %167 = vmatpush1.bf16.msra.mxu0 0
    %168 = vmatprep.subr.bf16.mxu0 0
    %169 = vmatpush1.bf16.msra.mxu0 0
    %170 = vmatprep.subr.bf16.mxu0 0
    %171 = vmatpush1.bf16.msra.mxu0 0
    %172 = vmatprep.subr.bf16.mxu0 0
    %173 = vmatpush1.bf16.msra.mxu0 0
    %174 = vmatprep.subr.bf16.mxu0 0
    %175 = vmatpush1.bf16.msra.mxu0 0
    %176 = vmatprep.subr.bf16.mxu0 0
    %177 = vmatpush1.bf16.msra.mxu0 0
    %178 = vmatprep.subr.bf16.mxu0 0
    %179 = vmatpush1.bf16.msra.mxu0 0
    %180 = vmatprep.subr.bf16.mxu0 0
    %181 = vmatpush1.bf16.msra.mxu0 0
    %182 = vmatprep.subr.bf16.mxu0 0
    %183 = vmatpush1.bf16.msra.mxu0 0
    %184 = vmatprep.subr.bf16.mxu0 0
    %185 = vmatpush1.bf16.msra.mxu0 0
    %186 = vmatprep.mubr.bf16.mxu0 0
    %187 = vmatmul.mubr.bf16.gmra.mrb[0].mxu0 %v148
    %v188 = vpop.f32.mrb[0].mxu0
    %v189 = vadd.f32 %v141, %v188
    %v190 = vpop.f32.mrb[0].mxu0
    %v191 = vpop.f32.mrb[0].mxu0
    %v192 = vpop.f32.mrb[0].mxu0
    %193 = vdwg.mxu0
    %v194 = vld [vmem:[%s6] sm:$0x1]
    %v196 = vlaneseq
    %v197 = vshrl.u32 %v196, 7
    %v198 = vsub.s32 0, %v197
    %v199 = vrot.slane %v194, %v198
    %v201 = vadd.f32 %v189, %v199
    %v202 = vxor.u32 %v201, 2147483648
    %v203 = vmul.f32 %v202, 1.442695
    %v204 = vpow.pop %v203
    %v205 = vadd.f32 %v204, 1.0
    %v206 = vrcp.pop %v205
    %v207 = vmul.f32 1.0, %v206
    %209 = vrot.lane.b32.xlu0 %v201, 32
    %v210 = vpop.permute.xlu0 %209
    %v212 = vmul.f32 %v207, %v210
    %214 = vrot.lane.b32.xlu0 %v212, 64
    %v215 = vpop.permute.xlu0 %214
    %v217 = vadd.f32 %v201, %v215
    %v218 = vtanh.pop %v217
    %v219 = vsub.f32 1.0, %v207
    %221 = vrot.lane.b32.xlu0 %v218, 96
    %v222 = vpop.permute.xlu0 %221
    %v224 = vmul.f32 %v219, %v222
    %226 = vrot.lane.b32.xlu0 %v81, 32
    %v227 = vpop.permute.xlu0 %226
    %v229 = vmul.f32 %v207, %v227
    %v230 = vadd.f32 %v224, %v229
    %v231 = vld [vmem:[%s7] sm:$0x1]
    %v233 = vlaneseq
    %v234 = vshrl.u32 %v233, 7
    %v235 = vsub.s32 0, %v234
    %v236 = vrot.slane %v231, %v235
    %237 = vrot.lane.b32.xlu0 %v236, 32
    %v238 = vpop.permute.xlu0 %237
    %v240 = vmul.f32 %v230, %v238
    %242 = vrot.lane.b32.xlu0 %v240, 96
    %v243 = vpop.permute.xlu0 %242
    %v245 = vsel %vm102, %v243, 0.0
    %246 = vadd.xlane.f32.xlu0 %v245
    %v247 = vpop.xlane.xlu0 %246
    %s248 = sld [smem:[#allocation2]]
    %v249 = vstv %s248
    %v250 = vadd.f32 %v247, %v249
    %vm251 = vcmask 7168
    %252 = vst.msk [vmem:[%s8] sm:$0xff] %vm251, %v250
    %v253 = vld [vmem:[#allocation3] sm:$0xff]
    %vm254 = vcmp.ge.u32.totalorder %v253, 858993459
    %v255 = vmul.f32 %v230, 1.25
    %257 = vrot.lane.b32.xlu0 %v255, 96
    %v258 = vpop.permute.xlu0 %257
    %v260 = vsel %vm254, %v258, 0.0
    %261 = vst.msk [vmem:[#allocation11] sm:$0xff] %vm102, %v260
    // Predicated region
    $region50: #{tpu_custom_call.1} parent=1 // pred_check
      _
    $region51: #{tpu_custom_call.1} parent=1 // pred_check_branch
      %263 = sbr.rel (0) target = $region53
    $region52: #{tpu_custom_call.1} parent=1 // pred_region
      _
    $region53: #{tpu_custom_call.1} parent=1 // pred_fallthru
      _
    // Predicated region
    $region54: #{tpu_custom_call.1} parent=1 // pred_check
      _
    $region55: #{tpu_custom_call.1} parent=1 // pred_check_branch
      %265 = sbr.rel (0) target = $region57
    $region56: #{tpu_custom_call.1} parent=1 // pred_region
      %s267 = ssub.s32 128, 128
      %268 = vsyncadd [#allocation5], %s267
      %s270 = sshll.u32 [#allocation11], 4
      %s271 = int_to_ptr.vmem [resolvable:$true] %s270
      %273 = dma.vmem_to_hbm [thread:$0]  %s271, 128, %s9, [#allocation5]
    $region57: #{tpu_custom_call.1} parent=1 // pred_fallthru
      _
    // Predicated region
    $region58: #{tpu_custom_call.1} parent=1 // pred_check
      _
    $region59: #{tpu_custom_call.1} parent=1 // pred_check_branch
      %275 = sbr.rel (0) target = $region61
    $region60: #{tpu_custom_call.1} parent=1 // pred_region
      _
    $region61: #{tpu_custom_call.1} parent=1 // pred_fallthru
      _
    // Predicated region
    $region62: #{tpu_custom_call.1} parent=1 // pred_check
      _
    $region63: #{tpu_custom_call.1} parent=1 // pred_check_branch
      %277 = sbr.rel (0) target = $region65
    $region64: #{tpu_custom_call.1} parent=1 // pred_region
      %278 = dma.done [#allocation5], 128
    $region65: #{tpu_custom_call.1} parent=1 // pred_fallthru
      _
    %279 = vsyncpa [#allocation4], 1
    %280 = vsyncpa [#allocation7], 1
    %281 = vsyncpa [#allocation10], 1
    %282 = vsyncpa [#allocation5], 1

</llo_original>
